<compile_context>
chip_gen: v7x
topology: tpu7x:2x2x1
jax: 0.10.0
libtpu: 0.0.40
codegen_flags: <defaults>
</compile_context>

<pallas_src>
import jax
import jax.numpy as jnp
from jax.experimental import pallas as pl
from jax.experimental.pallas import tpu as pltpu


def _neg_hsigmoid_kernel(x_ref, o_ref):
    # Strength-reduced relu6(3x+3)/6 - 0.5.  Compute in f32: a no-op for f32
    # inputs, and for bf16 inputs it keeps v5e (no bf16 VALU) on the native
    # f32 path while HBM traffic stays in the input dtype.
    x = x_ref[...].astype(jnp.float32)
    y = jnp.clip(0.5 * x, -0.5, 0.5)
    o_ref[...] = y.astype(o_ref.dtype)


# Prefer wide, lane-dense last dims (multiples of 128) so stores are unmasked vst.
_LANE_CANDIDATES = (2048, 1024, 512, 256, 128)
# ~2 MiB per block -> 4 live buffers (double-buffered input + output) ~= 8 MiB VMEM.
_TARGET_BLOCK_BYTES = 2 * 1024 * 1024


def neg_hsigmoid(x: jax.Array) -> jax.Array:
    """Elementwise relu6(3x+3)/6 - 0.5 via a Pallas TPU kernel. Any shape."""
    orig_shape = x.shape
    orig_dtype = x.dtype
    n = x.size
    if n == 0:
        return x

    # Flatten to 1-D, then reshape to a lane-dense (rows, lane) slab.
    flat = x.reshape(-1)
    lane = None
    for cand in _LANE_CANDIDATES:
        if n % cand == 0:
            lane = cand
            break
    pad = 0
    if lane is None:
        # Fallback for odd element counts: pad the flat vector to a multiple of 128.
        lane = 128
        pad = (-n) % lane
        flat = jnp.pad(flat, (0, pad))
    total = n + pad
    rows = total // lane
    x2 = flat.reshape(rows, lane)

    itemsize = jnp.dtype(orig_dtype).itemsize
    # Target ~2 MiB blocks; sublane tile must be a multiple of 8 (or the full
    # row extent, which is always a legal block shape).
    target_rows = max(8, _TARGET_BLOCK_BYTES // (lane * itemsize))
    target_rows = (target_rows // 8) * 8
    if rows <= target_rows:
        tile_r = rows          # block == full array dim -> always legal
    else:
        tile_r = target_rows   # multiple of 8; Pallas masks the trailing partial block

    grid = (pl.cdiv(rows, tile_r),)

    out2 = pl.pallas_call(
        _neg_hsigmoid_kernel,
        out_shape=jax.ShapeDtypeStruct((rows, lane), orig_dtype),
        grid_spec=pltpu.PrefetchScalarGridSpec(
            num_scalar_prefetch=0,
            grid=grid,
            in_specs=[pl.BlockSpec((tile_r, lane), lambda i: (i, 0))],
            out_specs=pl.BlockSpec((tile_r, lane), lambda i: (i, 0)),
        ),
        compiler_params=pltpu.CompilerParams(
            # Row-grid axis is embarrassingly parallel -> lets v7x shard blocks
            # across its 2 TensorCores; near-neutral on v5e/v6e.
            dimension_semantics=("parallel",),
        ),
    )(x2)

    out_flat = out2.reshape(-1)
    if pad:
        out_flat = out_flat[:n]
    return out_flat.reshape(orig_shape)


if __name__ == "__main__":
    key = jax.random.PRNGKey(0)
    # Small NCHW input consistent with the image-enhancement (LLIE) module.
    x = jax.random.normal(key, (2, 4, 16, 16), dtype=jnp.float32)

    out = neg_hsigmoid(x)
    out = jax.block_until_ready(out)

    # Reference check against plain JAX (original formulation).
    ref = jnp.clip(3.0 * x + 3.0, 0.0, 6.0) / 6.0 - 0.5
    assert out.shape == x.shape and out.dtype == x.dtype
    assert jnp.allclose(out, ref, atol=1e-6), "mismatch vs reference"

    print("KERNEL_OK")
</pallas_src>

<mosaic_0001>
module attributes {stable_mosaic.version = 11 : i64} {
  func.func @_neg_hsigmoid_kernel(%arg0: i32, %arg1: memref<1x2048xf32, #tpu.memory_space<vmem>>, %arg2: memref<1x2048xf32, #tpu.memory_space<vmem>>) attributes {dimension_semantics = [#tpu.dimension_semantics<parallel>], iteration_bounds = array<i64: 1>, scalar_prefetch = 0 : i64, scratch_operands = 0 : i64, tpu.core_type = #tpu.core_type<tc>, window_params = [{transform_indices = @transform_0, window_bounds = array<i64: 1, 2048>}, {transform_indices = @transform_1, window_bounds = array<i64: 1, 2048>}]} {
    %c0 = arith.constant 0 : index
    %c0_0 = arith.constant 0 : index
    %0 = vector.load %arg1[%c0, %c0_0] : memref<1x2048xf32, #tpu.memory_space<vmem>>, vector<1x2048xf32>
    %cst = arith.constant 5.000000e-01 : f32
    %1 = vector.broadcast %cst : f32 to vector<1x2048xf32>
    %2 = arith.mulf %1, %0 : vector<1x2048xf32>
    %cst_1 = arith.constant -5.000000e-01 : f32
    %cst_2 = arith.constant 5.000000e-01 : f32
    %3 = vector.broadcast %cst_1 : f32 to vector<1x2048xf32>
    %4 = arith.maximumf %3, %2 : vector<1x2048xf32>
    %5 = vector.broadcast %cst_2 : f32 to vector<1x2048xf32>
    %6 = arith.minimumf %5, %4 : vector<1x2048xf32>
    %c0_3 = arith.constant 0 : index
    %c0_4 = arith.constant 0 : index
    %7 = vector.load %arg2[%c0_3, %c0_4] : memref<1x2048xf32, #tpu.memory_space<vmem>>, vector<1x2048xf32>
    tpu.vector_store %arg2[%c0_3, %c0_4], %6 {strides = array<i32>} : memref<1x2048xf32, #tpu.memory_space<vmem>>, vector<1x2048xf32>,
    return
  }
  func.func @transform_0(%arg0: i32) -> (i32, i32) {
    %c0_i32 = arith.constant 0 : i32
    %c0_i32_0 = arith.constant 0 : i32
    return %arg0, %c0_i32 : i32, i32
  }
  func.func @transform_1(%arg0: i32) -> (i32, i32) {
    %c0_i32 = arith.constant 0 : i32
    %c0_i32_0 = arith.constant 0 : i32
    return %arg0, %c0_i32 : i32, i32
  }
}

</mosaic_0001>

<llo_original>
// kernel: tpu_custom_call.1
$region0: #{tpu_custom_call.1}
  #allocation0 [shape = 'u32[]', space=smem, size = 0x4, offset = 0x4, fixed_abs, tag = 'smem constant byte address 0x4 - core index']
  #allocation1 [shape = 'u32[144,128]{1,0:T(1,128)}', space=vmem, size = 0x12000, scoped, tag = 'internal scratch']
  %s0 = inlined_call_operand.hbm [shape: f32[1,2048], index: 0, kind: input, shape index: {}]
  %s1 = inlined_call_operand.hbm [shape: f32[1,2048], index: 1, kind: output, shape index: {}]
  %s2 = sld [smem:[#allocation0]]
  $region18: #{tpu_custom_call.1} parent=0
    _
  %s4 = ssub.s32 1, %s2
  %s5 = scalar_select 0, %s4, %s2
  $region1: #{tpu_custom_call.1} parent=0
    #allocation2 [shape = 'u8[8192]{0}', space=vmem, size = 0x2000, scoped, tag = 'input window, operand 0, single buffered']
    #allocation3 [shape = 's32[1]{0}', space=sflag, size = 0x4, scoped, tag = 'scoped memory for tpu_custom_call.1']
    #allocation4 [shape = 's32[1]{0}', space=sflag, size = 0x4, scoped, tag = 'scoped memory for tpu_custom_call.1']
    #allocation5 [shape = 'u8[8192]{0}', space=vmem, size = 0x2000, scoped, tag = 'output window, operand 0, single buffered']
    %6 = vsyncpa [#allocation3], 0
    %7 = vsyncpa [#allocation4], 0
    // Predicated region
    $region2: #{tpu_custom_call.1} parent=1 // pred_check
      _
    $region3: #{tpu_custom_call.1} parent=1 // pred_check_branch
      %9 = sbr.rel (0) target = $region5
    $region4: #{tpu_custom_call.1} parent=1 // pred_region
      %s11 = ssub.s32 256, 256
      %12 = vsyncadd [#allocation3], %s11
      %s14 = sshll.u32 [#allocation2], 4
      %s15 = int_to_ptr.vmem [resolvable:$true] %s14
      %17 = dma.hbm_to_vmem [thread:$0]  %s0, 256, %s15, [#allocation3]
    $region5: #{tpu_custom_call.1} parent=1 // pred_fallthru
      _
    // Predicated region
    $region6: #{tpu_custom_call.1} parent=1 // pred_check
      _
    $region7: #{tpu_custom_call.1} parent=1 // pred_check_branch
      %19 = sbr.rel (0) target = $region9
    $region8: #{tpu_custom_call.1} parent=1 // pred_region
      %20 = dma.done [#allocation3], 256
    $region9: #{tpu_custom_call.1} parent=1 // pred_fallthru
      _
    %v21 = vld [vmem:[#allocation2] sm:$0xff]
    %v22 = vld [vmem:[#allocation2 + $0x8] sm:$0xff]
    %v23 = vmul.f32 %v21, 0.5
    %v24 = vmul.f32 %v22, 0.5
    %v25 = vmax.f32 %v23, -0.5
    %v26 = vmax.f32 %v24, -0.5
    %v27 = vmin.f32 %v25, 0.5
    %v28 = vmin.f32 %v26, 0.5
    %29 = vst [vmem:[#allocation5] sm:$0xff] %v27
    %30 = vst [vmem:[#allocation5 + $0x8] sm:$0xff] %v28
    // Predicated region
    $region10: #{tpu_custom_call.1} parent=1 // pred_check
      _
    $region11: #{tpu_custom_call.1} parent=1 // pred_check_branch
      %32 = sbr.rel (0) target = $region13
    $region12: #{tpu_custom_call.1} parent=1 // pred_region
      %s34 = ssub.s32 256, 256
      %35 = vsyncadd [#allocation4], %s34
      %s37 = sshll.u32 [#allocation5], 4
      %s38 = int_to_ptr.vmem [resolvable:$true] %s37
      %40 = dma.vmem_to_hbm [thread:$0]  %s38, 256, %s1, [#allocation4]
    $region13: #{tpu_custom_call.1} parent=1 // pred_fallthru
      _
    // Predicated region
    $region14: #{tpu_custom_call.1} parent=1 // pred_check
      _
    $region15: #{tpu_custom_call.1} parent=1 // pred_check_branch
      %42 = sbr.rel (0) target = $region17
    $region16: #{tpu_custom_call.1} parent=1 // pred_region
      %43 = dma.done [#allocation4], 256
    $region17: #{tpu_custom_call.1} parent=1 // pred_fallthru
      _
    %44 = vsyncpa [#allocation3], 1
    %45 = vsyncpa [#allocation4], 1

</llo_original>
